<compile_context>
chip_gen: v6e
topology: v6e:2x2x1
jax: 0.10.0
libtpu: 0.0.40
codegen_flags: <defaults>
</compile_context>

<pallas_src>
import functools

import jax
import jax.numpy as jnp
from jax.experimental import pallas as pl
from jax.experimental.pallas import tpu as pltpu

NUM_STATES = 32            # nn.Linear(NUM_STATES, 64) -- module-level constant; pick 32
H1, H2, H3, OUT = 64, 128, 64, 29
OUT_PAD = 128              # lane-dense padded output width (29 -> 128)
BM_MAX = 2048              # max batch tile (per review: amortize ~0.35us/step overhead)
SMALL_BATCH = 512          # at/below this, use one full-extent block


def mlp_kernel(x_ref, w1_ref, b1_ref, w2_ref, b2_ref,
               w3_ref, b3_ref, w4_ref, b4_ref, o_ref):
    # bf16 operands on the MXU (f32 accumulation); bias + ReLU in f32.
    x = x_ref[...].astype(jnp.bfloat16)
    h = jnp.dot(x, w1_ref[...], preferred_element_type=jnp.float32) + b1_ref[...]
    h = jnp.maximum(h, 0.0).astype(jnp.bfloat16)
    h = jnp.dot(h, w2_ref[...], preferred_element_type=jnp.float32) + b2_ref[...]
    h = jnp.maximum(h, 0.0).astype(jnp.bfloat16)
    h = jnp.dot(h, w3_ref[...], preferred_element_type=jnp.float32) + b3_ref[...]
    h = jnp.maximum(h, 0.0).astype(jnp.bfloat16)
    h = jnp.dot(h, w4_ref[...], preferred_element_type=jnp.float32) + b4_ref[...]
    o_ref[...] = h.astype(o_ref.dtype)       # (bm, 128): unmasked lane-dense store


def _round_up(n, m):
    return ((n + m - 1) // m) * m


@functools.partial(jax.jit, static_argnames=("padded_output",))
def mlp_forward(x, kparams, padded_output=False):
    """x: (B, NUM_STATES) f32. kparams: bf16 weights (last layer padded to 128), f32 biases."""
    w1, b1, w2, b2, w3, b3, w4p, b4p = kparams
    B = x.shape[0]

    if B <= SMALL_BATCH:
        bm = B                                # one full-extent block (always legal)
    else:
        # >= 2 parallel grid steps (both v7x TensorCores), tile capped at BM_MAX.
        bm = min(BM_MAX, _round_up(pl.cdiv(B, 2), 8))
    grid = pl.cdiv(B, bm)

    def full(a):
        # Resident operand: constant index map, full-extent block.
        # (Optionally pipeline_mode=pl.Buffered(1) — skipped, negligible VMEM saving.)
        return pl.BlockSpec(a.shape, lambda i, _nd=a.ndim: (0,) * _nd)

    out = pl.pallas_call(
        mlp_kernel,
        # TODO(synk): bf16 out_shape would halve output writeback bytes (v5e/v6e win)
        # at the cost of exact f32 logit parity; kept f32 to match the PyTorch module.
        out_shape=jax.ShapeDtypeStruct((B, OUT_PAD), jnp.float32),
        grid_spec=pltpu.PrefetchScalarGridSpec(
            num_scalar_prefetch=0,
            grid=(grid,),
            in_specs=[
                pl.BlockSpec((bm, NUM_STATES), lambda i: (i, 0)),
                full(w1), full(b1),
                full(w2), full(b2),
                full(w3), full(b3),
                full(w4p), full(b4p),
            ],
            out_specs=pl.BlockSpec((bm, OUT_PAD), lambda i: (i, 0)),
        ),
        compiler_params=pltpu.CompilerParams(
            dimension_semantics=("parallel",),
            vmem_limit_bytes=32 * 1024 * 1024,
        ),
    )(x, w1, b1, w2, b2, w3, b3, w4p, b4p)

    if padded_output:
        return out                 # (B, 128) lane-padded: defer slicing to the consumer
    return out[:, :OUT]            # (B, 29): matches the PyTorch module's forward


def init_params(key):
    """Deterministic init mimicking nn.Linear default (uniform(-1/sqrt(fan_in), ...)), f32."""
    dims = [(NUM_STATES, H1), (H1, H2), (H2, H3), (H3, OUT)]
    params = []
    for i, (fan_in, fan_out) in enumerate(dims):
        kw, kb = jax.random.split(jax.random.fold_in(key, i))
        bound = 1.0 / (fan_in ** 0.5)
        w = jax.random.uniform(kw, (fan_in, fan_out), jnp.float32, -bound, bound)
        b = jax.random.uniform(kb, (1, fan_out), jnp.float32, -bound, bound)
        params += [w, b]
    return tuple(params)


def prepare_kernel_params(params):
    """One-time prep: pad last layer 29->128 (zeros) and cast weights to bf16."""
    w1, b1, w2, b2, w3, b3, w4, b4 = params
    w4p = jnp.pad(w4, ((0, 0), (0, OUT_PAD - OUT)))
    b4p = jnp.pad(b4, ((0, 0), (0, OUT_PAD - OUT)))
    bf = lambda w: w.astype(jnp.bfloat16)
    return (bf(w1), b1, bf(w2), b2, bf(w3), b3, bf(w4p), b4p)


def mlp_reference(x, params):
    """Pure-JAX f32 reference matching the PyTorch module."""
    w1, b1, w2, b2, w3, b3, w4, b4 = params
    h = jnp.maximum(x @ w1 + b1, 0.0)
    h = jnp.maximum(h @ w2 + b2, 0.0)
    h = jnp.maximum(h @ w3 + b3, 0.0)
    return h @ w4 + b4


if __name__ == "__main__":
    key = jax.random.PRNGKey(0)
    kx, kp = jax.random.split(key)

    params_f32 = init_params(kp)
    kparams = jax.tree_util.tree_map(jax.block_until_ready,
                                     prepare_kernel_params(params_f32))

    # Reference with bf16-rounded weights (isolates the in-kernel activation rounding).
    params_q = tuple(p.astype(jnp.bfloat16).astype(jnp.float32) if p.shape[0] != 1 else p
                     for p in params_f32)

    # batch=8 / 10: small-batch path, single full-extent block (10 tests non-8-multiple).
    # batch=640:    bm=320, grid of 2 "parallel" steps (both v7x TensorCores busy).
    for batch in (8, 10, 640):
        x = jax.random.normal(jax.random.fold_in(kx, batch),
                              (batch, NUM_STATES), jnp.float32)
        out = jax.block_until_ready(mlp_forward(x, kparams))
        assert out.shape == (batch, OUT), out.shape

        ref_q = mlp_reference(x, params_q)       # tight check vs bf16-weight reference
        assert jnp.allclose(out, ref_q, atol=2e-2, rtol=2e-2), \
            f"mismatch vs bf16-weight reference (batch={batch})"

        ref_f32 = mlp_reference(x, params_f32)   # loose sanity check vs pure f32 module
        assert jnp.allclose(out, ref_f32, atol=1e-1, rtol=1e-1), \
            f"mismatch vs f32 reference (batch={batch})"

    print("KERNEL_OK")
</pallas_src>

<mosaic_0001>
module attributes {stable_mosaic.version = 11 : i64} {
  func.func @mlp_kernel(%arg0: i32, %arg1: memref<8x32xf32, #tpu.memory_space<vmem>>, %arg2: memref<32x64xbf16, #tpu.memory_space<vmem>>, %arg3: memref<1x64xf32, #tpu.memory_space<vmem>>, %arg4: memref<64x128xbf16, #tpu.memory_space<vmem>>, %arg5: memref<1x128xf32, #tpu.memory_space<vmem>>, %arg6: memref<128x64xbf16, #tpu.memory_space<vmem>>, %arg7: memref<1x64xf32, #tpu.memory_space<vmem>>, %arg8: memref<64x128xbf16, #tpu.memory_space<vmem>>, %arg9: memref<1x128xf32, #tpu.memory_space<vmem>>, %arg10: memref<8x128xf32, #tpu.memory_space<vmem>>) attributes {dimension_semantics = [#tpu.dimension_semantics<parallel>], iteration_bounds = array<i64: 1>, scalar_prefetch = 0 : i64, scratch_operands = 0 : i64, tpu.core_type = #tpu.core_type<tc>, window_params = [{transform_indices = @transform_0, window_bounds = array<i64: 8, 32>}, {pipeline_mode = #tpu.pipeline_mode<synchronous>, transform_indices = @transform_1, window_bounds = array<i64: 32, 64>}, {pipeline_mode = #tpu.pipeline_mode<synchronous>, transform_indices = @transform_2, window_bounds = array<i64: 1, 64>}, {pipeline_mode = #tpu.pipeline_mode<synchronous>, transform_indices = @transform_3, window_bounds = array<i64: 64, 128>}, {pipeline_mode = #tpu.pipeline_mode<synchronous>, transform_indices = @transform_4, window_bounds = array<i64: 1, 128>}, {pipeline_mode = #tpu.pipeline_mode<synchronous>, transform_indices = @transform_5, window_bounds = array<i64: 128, 64>}, {pipeline_mode = #tpu.pipeline_mode<synchronous>, transform_indices = @transform_6, window_bounds = array<i64: 1, 64>}, {pipeline_mode = #tpu.pipeline_mode<synchronous>, transform_indices = @transform_7, window_bounds = array<i64: 64, 128>}, {pipeline_mode = #tpu.pipeline_mode<synchronous>, transform_indices = @transform_8, window_bounds = array<i64: 1, 128>}, {transform_indices = @transform_9, window_bounds = array<i64: 8, 128>}]} {
    %c0 = arith.constant 0 : index
    %c0_0 = arith.constant 0 : index
    %0 = vector.load %arg1[%c0, %c0_0] : memref<8x32xf32, #tpu.memory_space<vmem>>, vector<8x32xf32>
    %1 = arith.truncf %0 : vector<8x32xf32> to vector<8x32xbf16>
    %c0_1 = arith.constant 0 : index
    %c0_2 = arith.constant 0 : index
    %2 = vector.load %arg2[%c0_1, %c0_2] : memref<32x64xbf16, #tpu.memory_space<vmem>>, vector<32x64xbf16>
    %cst = arith.constant dense<0.000000e+00> : vector<8x64xf32>
    %3 = tpu.matmul %1, %2, %cst {dimension_numbers = #tpu.dot_dimension_numbers<[1], [0], [0], [1], [0, 0, 1, 1], [], []>} : vector<8x32xbf16>, vector<32x64xbf16>, vector<8x64xf32> -> vector<8x64xf32>
    %c0_3 = arith.constant 0 : index
    %c0_4 = arith.constant 0 : index
    %4 = vector.load %arg3[%c0_3, %c0_4] : memref<1x64xf32, #tpu.memory_space<vmem>>, vector<1x64xf32>
    %5 = vector.broadcast %4 : vector<1x64xf32> to vector<8x64xf32>
    %6 = arith.addf %3, %5 : vector<8x64xf32>
    %cst_5 = arith.constant 0.000000e+00 : f32
    %7 = vector.broadcast %cst_5 : f32 to vector<8x64xf32>
    %8 = arith.maximumf %6, %7 : vector<8x64xf32>
    %9 = arith.truncf %8 : vector<8x64xf32> to vector<8x64xbf16>
    %c0_6 = arith.constant 0 : index
    %c0_7 = arith.constant 0 : index
    %10 = vector.load %arg4[%c0_6, %c0_7] : memref<64x128xbf16, #tpu.memory_space<vmem>>, vector<64x128xbf16>
    %cst_8 = arith.constant dense<0.000000e+00> : vector<8x128xf32>
    %11 = tpu.matmul %9, %10, %cst_8 {dimension_numbers = #tpu.dot_dimension_numbers<[1], [0], [0], [1], [0, 0, 1, 1], [], []>} : vector<8x64xbf16>, vector<64x128xbf16>, vector<8x128xf32> -> vector<8x128xf32>
    %c0_9 = arith.constant 0 : index
    %c0_10 = arith.constant 0 : index
    %12 = vector.load %arg5[%c0_9, %c0_10] : memref<1x128xf32, #tpu.memory_space<vmem>>, vector<1x128xf32>
    %13 = vector.broadcast %12 : vector<1x128xf32> to vector<8x128xf32>
    %14 = arith.addf %11, %13 : vector<8x128xf32>
    %cst_11 = arith.constant 0.000000e+00 : f32
    %15 = vector.broadcast %cst_11 : f32 to vector<8x128xf32>
    %16 = arith.maximumf %14, %15 : vector<8x128xf32>
    %17 = arith.truncf %16 : vector<8x128xf32> to vector<8x128xbf16>
    %c0_12 = arith.constant 0 : index
    %c0_13 = arith.constant 0 : index
    %18 = vector.load %arg6[%c0_12, %c0_13] : memref<128x64xbf16, #tpu.memory_space<vmem>>, vector<128x64xbf16>
    %cst_14 = arith.constant dense<0.000000e+00> : vector<8x64xf32>
    %19 = tpu.matmul %17, %18, %cst_14 {dimension_numbers = #tpu.dot_dimension_numbers<[1], [0], [0], [1], [0, 0, 1, 1], [], []>} : vector<8x128xbf16>, vector<128x64xbf16>, vector<8x64xf32> -> vector<8x64xf32>
    %c0_15 = arith.constant 0 : index
    %c0_16 = arith.constant 0 : index
    %20 = vector.load %arg7[%c0_15, %c0_16] : memref<1x64xf32, #tpu.memory_space<vmem>>, vector<1x64xf32>
    %21 = vector.broadcast %20 : vector<1x64xf32> to vector<8x64xf32>
    %22 = arith.addf %19, %21 : vector<8x64xf32>
    %cst_17 = arith.constant 0.000000e+00 : f32
    %23 = vector.broadcast %cst_17 : f32 to vector<8x64xf32>
    %24 = arith.maximumf %22, %23 : vector<8x64xf32>
    %25 = arith.truncf %24 : vector<8x64xf32> to vector<8x64xbf16>
    %c0_18 = arith.constant 0 : index
    %c0_19 = arith.constant 0 : index
    %26 = vector.load %arg8[%c0_18, %c0_19] : memref<64x128xbf16, #tpu.memory_space<vmem>>, vector<64x128xbf16>
    %cst_20 = arith.constant dense<0.000000e+00> : vector<8x128xf32>
    %27 = tpu.matmul %25, %26, %cst_20 {dimension_numbers = #tpu.dot_dimension_numbers<[1], [0], [0], [1], [0, 0, 1, 1], [], []>} : vector<8x64xbf16>, vector<64x128xbf16>, vector<8x128xf32> -> vector<8x128xf32>
    %c0_21 = arith.constant 0 : index
    %c0_22 = arith.constant 0 : index
    %28 = vector.load %arg9[%c0_21, %c0_22] : memref<1x128xf32, #tpu.memory_space<vmem>>, vector<1x128xf32>
    %29 = vector.broadcast %28 : vector<1x128xf32> to vector<8x128xf32>
    %30 = arith.addf %27, %29 : vector<8x128xf32>
    %c0_23 = arith.constant 0 : index
    %c0_24 = arith.constant 0 : index
    %31 = vector.load %arg10[%c0_23, %c0_24] : memref<8x128xf32, #tpu.memory_space<vmem>>, vector<8x128xf32>
    tpu.vector_store %arg10[%c0_23, %c0_24], %30 {strides = array<i32>} : memref<8x128xf32, #tpu.memory_space<vmem>>, vector<8x128xf32>,
    return
  }
  func.func @transform_0(%arg0: i32) -> (i32, i32) {
    %c0_i32 = arith.constant 0 : i32
    %c0_i32_0 = arith.constant 0 : i32
    return %arg0, %c0_i32 : i32, i32
  }
  func.func @transform_1(%arg0: i32) -> (i32, i32) {
    %c0_i32 = arith.constant 0 : i32
    %c0_i32_0 = arith.constant 0 : i32
    %c0_i32_1 = arith.constant 0 : i32
    return %c0_i32, %c0_i32_0 : i32, i32
  }
  func.func @transform_2(%arg0: i32) -> (i32, i32) {
    %c0_i32 = arith.constant 0 : i32
    %c0_i32_0 = arith.constant 0 : i32
    %c0_i32_1 = arith.constant 0 : i32
    return %c0_i32, %c0_i32_0 : i32, i32
  }
  func.func @transform_3(%arg0: i32) -> (i32, i32) {
    %c0_i32 = arith.constant 0 : i32
    %c0_i32_0 = arith.constant 0 : i32
    %c0_i32_1 = arith.constant 0 : i32
    return %c0_i32, %c0_i32_0 : i32, i32
  }
  func.func @transform_4(%arg0: i32) -> (i32, i32) {
    %c0_i32 = arith.constant 0 : i32
    %c0_i32_0 = arith.constant 0 : i32
    %c0_i32_1 = arith.constant 0 : i32
    return %c0_i32, %c0_i32_0 : i32, i32
  }
  func.func @transform_5(%arg0: i32) -> (i32, i32) {
    %c0_i32 = arith.constant 0 : i32
    %c0_i32_0 = arith.constant 0 : i32
    %c0_i32_1 = arith.constant 0 : i32
    return %c0_i32, %c0_i32_0 : i32, i32
  }
  func.func @transform_6(%arg0: i32) -> (i32, i32) {
    %c0_i32 = arith.constant 0 : i32
    %c0_i32_0 = arith.constant 0 : i32
    %c0_i32_1 = arith.constant 0 : i32
    return %c0_i32, %c0_i32_0 : i32, i32
  }
  func.func @transform_7(%arg0: i32) -> (i32, i32) {
    %c0_i32 = arith.constant 0 : i32
    %c0_i32_0 = arith.constant 0 : i32
    %c0_i32_1 = arith.constant 0 : i32
    return %c0_i32, %c0_i32_0 : i32, i32
  }
  func.func @transform_8(%arg0: i32) -> (i32, i32) {
    %c0_i32 = arith.constant 0 : i32
    %c0_i32_0 = arith.constant 0 : i32
    %c0_i32_1 = arith.constant 0 : i32
    return %c0_i32, %c0_i32_0 : i32, i32
  }
  func.func @transform_9(%arg0: i32) -> (i32, i32) {
    %c0_i32 = arith.constant 0 : i32
    %c0_i32_0 = arith.constant 0 : i32
    return %arg0, %c0_i32 : i32, i32
  }
}

</mosaic_0001>

<llo_original>
// kernel: mlp_forward.1
$region0: #{mlp_forward.1}
  #allocation0 [shape = 'u32[]', space=smem, size = 0x4, offset = 0x4, fixed_abs, tag = 'smem constant byte address 0x4 - core index']
  #allocation1 [shape = 'u32[144,128]{1,0:T(1,128)}', space=vmem, size = 0x12000, scoped, tag = 'internal scratch']
  %s0 = inlined_call_operand.vmem [shape: f32[8,32], index: 0, kind: input, shape index: {}]
  %s1 = inlined_call_operand.vmem [shape: bf16[32,64], index: 1, kind: input, shape index: {}]
  %s2 = inlined_call_operand.vmem [shape: f32[1,64], index: 2, kind: input, shape index: {}]
  %s3 = inlined_call_operand.vmem [shape: bf16[64,128], index: 3, kind: input, shape index: {}]
  %s4 = inlined_call_operand.vmem [shape: f32[1,128], index: 4, kind: input, shape index: {}]
  %s5 = inlined_call_operand.vmem [shape: bf16[128,64], index: 5, kind: input, shape index: {}]
  %s6 = inlined_call_operand.vmem [shape: f32[1,64], index: 6, kind: input, shape index: {}]
  %s7 = inlined_call_operand.vmem [shape: bf16[64,128], index: 7, kind: input, shape index: {}]
  %s8 = inlined_call_operand.vmem [shape: f32[1,128], index: 8, kind: input, shape index: {}]
  %s9 = inlined_call_operand.hbm [shape: f32[8,128], index: 9, kind: output, shape index: {}]
  %s10 = sld [smem:[#allocation0]]
  $region46: #{mlp_forward.1} parent=0
    _
  %s12 = ssub.s32 1, %s10
  %s13 = scalar_select 0, %s12, %s10
  $region1: #{mlp_forward.1} parent=0
    #allocation2 [shape = 'u8[4096]{0}', space=vmem, size = 0x1000, scoped, tag = 'output window, operand 0, single buffered']
    #allocation3 [shape = 's32[1]{0}', space=sflag, size = 0x4, scoped, tag = 'scoped memory for mlp_forward.1']
    %14 = vsyncpa [#allocation3], 0
    // Predicated region
    $region2: #{mlp_forward.1} parent=1 // pred_check
      _
    $region3: #{mlp_forward.1} parent=1 // pred_check_branch
      %16 = sbr.rel (0) target = $region5
    $region4: #{mlp_forward.1} parent=1 // pred_region
      _
    $region5: #{mlp_forward.1} parent=1 // pred_fallthru
      _
    // Predicated region
    $region6: #{mlp_forward.1} parent=1 // pred_check
      _
    $region7: #{mlp_forward.1} parent=1 // pred_check_branch
      %18 = sbr.rel (0) target = $region9
    $region8: #{mlp_forward.1} parent=1 // pred_region
      _
    $region9: #{mlp_forward.1} parent=1 // pred_fallthru
      _
    // Predicated region
    $region10: #{mlp_forward.1} parent=1 // pred_check
      _
    $region11: #{mlp_forward.1} parent=1 // pred_check_branch
      %20 = sbr.rel (0) target = $region13
    $region12: #{mlp_forward.1} parent=1 // pred_region
      _
    $region13: #{mlp_forward.1} parent=1 // pred_fallthru
      _
    // Predicated region
    $region14: #{mlp_forward.1} parent=1 // pred_check
      _
    $region15: #{mlp_forward.1} parent=1 // pred_check_branch
      %22 = sbr.rel (0) target = $region17
    $region16: #{mlp_forward.1} parent=1 // pred_region
      _
    $region17: #{mlp_forward.1} parent=1 // pred_fallthru
      _
    // Predicated region
    $region18: #{mlp_forward.1} parent=1 // pred_check
      _
    $region19: #{mlp_forward.1} parent=1 // pred_check_branch
      %24 = sbr.rel (0) target = $region21
    $region20: #{mlp_forward.1} parent=1 // pred_region
      _
    $region21: #{mlp_forward.1} parent=1 // pred_fallthru
      _
    // Predicated region
    $region22: #{mlp_forward.1} parent=1 // pred_check
      _
    $region23: #{mlp_forward.1} parent=1 // pred_check_branch
      %26 = sbr.rel (0) target = $region25
    $region24: #{mlp_forward.1} parent=1 // pred_region
      _
    $region25: #{mlp_forward.1} parent=1 // pred_fallthru
      _
    // Predicated region
    $region26: #{mlp_forward.1} parent=1 // pred_check
      _
    $region27: #{mlp_forward.1} parent=1 // pred_check_branch
      %28 = sbr.rel (0) target = $region29
    $region28: #{mlp_forward.1} parent=1 // pred_region
      _
    $region29: #{mlp_forward.1} parent=1 // pred_fallthru
      _
    // Predicated region
    $region30: #{mlp_forward.1} parent=1 // pred_check
      _
    $region31: #{mlp_forward.1} parent=1 // pred_check_branch
      %30 = sbr.rel (0) target = $region33
    $region32: #{mlp_forward.1} parent=1 // pred_region
      _
    $region33: #{mlp_forward.1} parent=1 // pred_fallthru
      _
    // Predicated region
    $region34: #{mlp_forward.1} parent=1 // pred_check
      _
    $region35: #{mlp_forward.1} parent=1 // pred_check_branch
      %32 = sbr.rel (0) target = $region37
    $region36: #{mlp_forward.1} parent=1 // pred_region
      _
    $region37: #{mlp_forward.1} parent=1 // pred_fallthru
      _
    %v34 = vld [vmem:[%s0] sm:$0xff]
    %v35 = vpack.c.bf16 %v34, %v34
    %v36 = vld [vmem:[%s1] sm:$0xf]
    %v37 = vld [vmem:[%s1 + $0x4] sm:$0xf]
    %v38 = vld [vmem:[%s1 + $0x8] sm:$0xf]
    %v39 = vld [vmem:[%s1 + $0xc] sm:$0xf]
    %v40 = vld [vmem:[%s2] sm:$0x1]
    %v42 = vlaneseq
    %v43 = vshrl.u32 %v42, 7
    %v44 = vsub.s32 0, %v43
    %v45 = vrot.slane %v40, %v44
    %v51 = vunpack.c.l.b16 %v36
    %v52 = vunpack.c.l.b16 %v37
    %v53 = vunpack.c.l.b16 %v38
    %v54 = vunpack.c.l.b16 %v39
    %v55 = vpack.c.b16 %v52, %v51
    %v56 = vpack.c.b16 %v54, %v53
    %vm59 = vcmask 261120
    %v61 = vsel %vm59, %v35, 0
    %63 = vmatprep.subr.bf16.mxu0 0
    %64 = vmatpush1.bf16.msra.mxu0 0
    %65 = vmatprep.subr.bf16.mxu0 0
    %66 = vmatpush1.bf16.msra.mxu0 0
    %67 = vmatprep.subr.bf16.mxu0 0
    %68 = vmatpush1.bf16.msra.mxu0 0
    %69 = vmatprep.subr.bf16.mxu0 0
    %70 = vmatpush1.bf16.msra.mxu0 0
    %71 = vmatprep.subr.bf16.mxu0 0
    %72 = vmatpush1.bf16.msra.mxu0 0
    %73 = vmatprep.subr.bf16.mxu0 0
    %74 = vmatpush1.bf16.msra.mxu0 0
    %75 = vmatprep.subr.bf16.mxu0 0
    %76 = vmatpush1.bf16.msra.mxu0 %v56
    %77 = vmatprep.subr.bf16.mxu0 0
    %78 = vmatpush1.bf16.msra.mxu0 %v55
    %79 = vmatprep.subr.bf16.mxu0 0
    %80 = vmatpush2.bf16.msra.mxu0 0
    %81 = vmatprep.subr.bf16.mxu0 0
    %82 = vmatpush2.bf16.msra.mxu0 0
    %83 = vmatprep.subr.bf16.mxu0 0
    %84 = vmatpush2.bf16.msra.mxu0 0
    %85 = vmatprep.subr.bf16.mxu0 0
    %86 = vmatpush2.bf16.msra.mxu0 0
    %87 = vmatprep.subr.bf16.mxu0 0
    %88 = vmatpush2.bf16.msra.mxu0 0
    %89 = vmatprep.subr.bf16.mxu0 0
    %90 = vmatpush2.bf16.msra.mxu0 0
    %91 = vmatprep.subr.bf16.mxu0 0
    %92 = vmatpush2.bf16.msra.mxu0 0
    %93 = vmatprep.subr.bf16.mxu0 0
    %94 = vmatpush2.bf16.msra.mxu0 0
    %95 = vmatprep.mubr.bf16.mxu0 0
    %96 = vmatmul.mubr.bf16.gmra.mxu0 %v61
    %v97 = vpop.f32.mrf.mxu0
    %v98 = vadd.f32 %v45, %v97
    %v99 = vpop.f32.mrf.mxu0
    %v100 = vpop.f32.mrf.mxu0
    %v101 = vpop.f32.mrf.mxu0
    %102 = vdwg.mxu0
    %v103 = vmax.f32 %v98, 0.0
    %v104 = vpack.c.bf16 %v103, %v103
    %v105 = vld [vmem:[%s3] sm:$0xf]
    %v106 = vld [vmem:[%s3 + $0x4] sm:$0xf]
    %v107 = vld [vmem:[%s3 + $0x8] sm:$0xf]
    %v108 = vld [vmem:[%s3 + $0xc] sm:$0xf]
    %v109 = vld [vmem:[%s3 + $0x10] sm:$0xf]
    %v110 = vld [vmem:[%s3 + $0x14] sm:$0xf]
    %v111 = vld [vmem:[%s3 + $0x18] sm:$0xf]
    %v112 = vld [vmem:[%s3 + $0x1c] sm:$0xf]
    %v113 = vld [vmem:[%s4] sm:$0x1]
    %v115 = vlaneseq
    %v116 = vshrl.u32 %v115, 7
    %v117 = vsub.s32 0, %v116
    %v118 = vrot.slane %v113, %v117
    %v128 = vunpack.c.l.b16 %v105
    %v129 = vunpack.c.l.b16 %v106
    %v130 = vunpack.c.l.b16 %v107
    %v131 = vunpack.c.l.b16 %v108
    %v132 = vunpack.c.l.b16 %v109
    %v133 = vunpack.c.l.b16 %v110
    %v134 = vunpack.c.l.b16 %v111
    %v135 = vunpack.c.l.b16 %v112
    %v136 = vpack.c.b16 %v129, %v128
    %v137 = vpack.c.b16 %v131, %v130
    %v138 = vpack.c.b16 %v133, %v132
    %v139 = vpack.c.b16 %v135, %v134
    %vm144 = vcmask 523264
    %v146 = vsel %vm144, %v104, 0
    %148 = vmatprep.subr.bf16.mxu0 0
    %149 = vmatpush1.bf16.msra.mxu0 0
    %150 = vmatprep.subr.bf16.mxu0 0
    %151 = vmatpush1.bf16.msra.mxu0 0
    %152 = vmatprep.subr.bf16.mxu0 0
    %153 = vmatpush1.bf16.msra.mxu0 0
    %154 = vmatprep.subr.bf16.mxu0 0
    %155 = vmatpush1.bf16.msra.mxu0 0
    %156 = vmatprep.subr.bf16.mxu0 0
    %157 = vmatpush1.bf16.msra.mxu0 %v139
    %158 = vmatprep.subr.bf16.mxu0 0
    %159 = vmatpush1.bf16.msra.mxu0 %v138
    %160 = vmatprep.subr.bf16.mxu0 0
    %161 = vmatpush1.bf16.msra.mxu0 %v137
    %162 = vmatprep.subr.bf16.mxu0 0
    %163 = vmatpush1.bf16.msra.mxu0 %v136
    %164 = vmatprep.subr.bf16.mxu0 0
    %165 = vmatpush2.bf16.msra.mxu0 0
    %166 = vmatprep.subr.bf16.mxu0 0
    %167 = vmatpush2.bf16.msra.mxu0 0
    %168 = vmatprep.subr.bf16.mxu0 0
    %169 = vmatpush2.bf16.msra.mxu0 0
    %170 = vmatprep.subr.bf16.mxu0 0
    %171 = vmatpush2.bf16.msra.mxu0 0
    %172 = vmatprep.subr.bf16.mxu0 0
    %173 = vmatpush2.bf16.msra.mxu0 0
    %174 = vmatprep.subr.bf16.mxu0 0
    %175 = vmatpush2.bf16.msra.mxu0 0
    %176 = vmatprep.subr.bf16.mxu0 0
    %177 = vmatpush2.bf16.msra.mxu0 0
    %178 = vmatprep.subr.bf16.mxu0 0
    %179 = vmatpush2.bf16.msra.mxu0 0
    %180 = vmatprep.mubr.bf16.mxu0 0
    %181 = vmatmul.mubr.bf16.gmra.mxu0 %v146
    %v182 = vpop.f32.mrf.mxu0
    %v183 = vadd.f32 %v118, %v182
    %v184 = vpop.f32.mrf.mxu0
    %v185 = vpop.f32.mrf.mxu0
    %v186 = vpop.f32.mrf.mxu0
    %187 = vdwg.mxu0
    %v188 = vmax.f32 %v183, 0.0
    %v189 = vpack.c.bf16 %v188, %v188
    %v190 = vld [vmem:[%s5] sm:$0xf]
    %v191 = vld [vmem:[%s5 + $0x4] sm:$0xf]
    %v192 = vld [vmem:[%s5 + $0x8] sm:$0xf]
    %v193 = vld [vmem:[%s5 + $0xc] sm:$0xf]
    %v194 = vld [vmem:[%s5 + $0x10] sm:$0xf]
    %v195 = vld [vmem:[%s5 + $0x14] sm:$0xf]
    %v196 = vld [vmem:[%s5 + $0x18] sm:$0xf]
    %v197 = vld [vmem:[%s5 + $0x1c] sm:$0xf]
    %v198 = vld [vmem:[%s5 + $0x20] sm:$0xf]
    %v199 = vld [vmem:[%s5 + $0x24] sm:$0xf]
    %v200 = vld [vmem:[%s5 + $0x28] sm:$0xf]
    %v201 = vld [vmem:[%s5 + $0x2c] sm:$0xf]
    %v202 = vld [vmem:[%s5 + $0x30] sm:$0xf]
    %v203 = vld [vmem:[%s5 + $0x34] sm:$0xf]
    %v204 = vld [vmem:[%s5 + $0x38] sm:$0xf]
    %v205 = vld [vmem:[%s5 + $0x3c] sm:$0xf]
    %v206 = vld [vmem:[%s6] sm:$0x1]
    %v208 = vlaneseq
    %v209 = vshrl.u32 %v208, 7
    %v210 = vsub.s32 0, %v209
    %v211 = vrot.slane %v206, %v210
    %v229 = vunpack.c.l.b16 %v190
    %v230 = vunpack.c.l.b16 %v191
    %v231 = vunpack.c.l.b16 %v192
    %v232 = vunpack.c.l.b16 %v193
    %v233 = vunpack.c.l.b16 %v194
    %v234 = vunpack.c.l.b16 %v195
    %v235 = vunpack.c.l.b16 %v196
    %v236 = vunpack.c.l.b16 %v197
    %v237 = vunpack.c.l.b16 %v198
    %v238 = vunpack.c.l.b16 %v199
    %v239 = vunpack.c.l.b16 %v200
    %v240 = vunpack.c.l.b16 %v201
    %v241 = vunpack.c.l.b16 %v202
    %v242 = vunpack.c.l.b16 %v203
    %v243 = vunpack.c.l.b16 %v204
    %v244 = vunpack.c.l.b16 %v205
    %v245 = vpack.c.b16 %v230, %v229
    %v246 = vpack.c.b16 %v232, %v231
    %v247 = vpack.c.b16 %v234, %v233
    %v248 = vpack.c.b16 %v236, %v235
    %v249 = vpack.c.b16 %v238, %v237
    %v250 = vpack.c.b16 %v240, %v239
    %v251 = vpack.c.b16 %v242, %v241
    %v252 = vpack.c.b16 %v244, %v243
    %261 = vmatprep.subr.bf16.mxu0 0
    %262 = vmatpush1.bf16.msra.mxu0 %v252
    %263 = vmatprep.subr.bf16.mxu0 0
    %264 = vmatpush1.bf16.msra.mxu0 %v251
    %265 = vmatprep.subr.bf16.mxu0 0
    %266 = vmatpush1.bf16.msra.mxu0 %v250
    %267 = vmatprep.subr.bf16.mxu0 0
    %268 = vmatpush1.bf16.msra.mxu0 %v249
    %269 = vmatprep.subr.bf16.mxu0 0
    %270 = vmatpush1.bf16.msra.mxu0 %v248
    %271 = vmatprep.subr.bf16.mxu0 0
    %272 = vmatpush1.bf16.msra.mxu0 %v247
    %273 = vmatprep.subr.bf16.mxu0 0
    %274 = vmatpush1.bf16.msra.mxu0 %v246
    %275 = vmatprep.subr.bf16.mxu0 0
    %276 = vmatpush1.bf16.msra.mxu0 %v245
    %277 = vmatprep.subr.bf16.mxu0 0
    %278 = vmatpush2.bf16.msra.mxu0 0
    %279 = vmatprep.subr.bf16.mxu0 0
    %280 = vmatpush2.bf16.msra.mxu0 0
    %281 = vmatprep.subr.bf16.mxu0 0
    %282 = vmatpush2.bf16.msra.mxu0 0
    %283 = vmatprep.subr.bf16.mxu0 0
    %284 = vmatpush2.bf16.msra.mxu0 0
    %285 = vmatprep.subr.bf16.mxu0 0
    %286 = vmatpush2.bf16.msra.mxu0 0
    %287 = vmatprep.subr.bf16.mxu0 0
    %288 = vmatpush2.bf16.msra.mxu0 0
    %289 = vmatprep.subr.bf16.mxu0 0
    %290 = vmatpush2.bf16.msra.mxu0 0
    %291 = vmatprep.subr.bf16.mxu0 0
    %292 = vmatpush2.bf16.msra.mxu0 0
    %293 = vmatprep.mubr.bf16.mxu0 0
    %294 = vmatmul.mubr.bf16.gmra.mxu0 %v189
    %v295 = vpop.f32.mrf.mxu0
    %v296 = vadd.f32 %v211, %v295
    %v297 = vpop.f32.mrf.mxu0
    %v298 = vpop.f32.mrf.mxu0
    %v299 = vpop.f32.mrf.mxu0
    %300 = vdwg.mxu0
    %v301 = vmax.f32 %v296, 0.0
    %v302 = vpack.c.bf16 %v301, %v301
    %v303 = vld [vmem:[%s7] sm:$0xf]
    %v304 = vld [vmem:[%s7 + $0x4] sm:$0xf]
    %v305 = vld [vmem:[%s7 + $0x8] sm:$0xf]
    %v306 = vld [vmem:[%s7 + $0xc] sm:$0xf]
    %v307 = vld [vmem:[%s7 + $0x10] sm:$0xf]
    %v308 = vld [vmem:[%s7 + $0x14] sm:$0xf]
    %v309 = vld [vmem:[%s7 + $0x18] sm:$0xf]
    %v310 = vld [vmem:[%s7 + $0x1c] sm:$0xf]
    %v311 = vld [vmem:[%s8] sm:$0x1]
    %v313 = vlaneseq
    %v314 = vshrl.u32 %v313, 7
    %v315 = vsub.s32 0, %v314
    %v316 = vrot.slane %v311, %v315
    %v326 = vunpack.c.l.b16 %v303
    %v327 = vunpack.c.l.b16 %v304
    %v328 = vunpack.c.l.b16 %v305
    %v329 = vunpack.c.l.b16 %v306
    %v330 = vunpack.c.l.b16 %v307
    %v331 = vunpack.c.l.b16 %v308
    %v332 = vunpack.c.l.b16 %v309
    %v333 = vunpack.c.l.b16 %v310
    %v334 = vpack.c.b16 %v327, %v326
    %v335 = vpack.c.b16 %v329, %v328
    %v336 = vpack.c.b16 %v331, %v330
    %v337 = vpack.c.b16 %v333, %v332
    %v343 = vsel %vm144, %v302, 0
    %345 = vmatprep.subr.bf16.mxu0 0
    %346 = vmatpush1.bf16.msra.mxu0 0
    %347 = vmatprep.subr.bf16.mxu0 0
    %348 = vmatpush1.bf16.msra.mxu0 0
    %349 = vmatprep.subr.bf16.mxu0 0
    %350 = vmatpush1.bf16.msra.mxu0 0
    %351 = vmatprep.subr.bf16.mxu0 0
    %352 = vmatpush1.bf16.msra.mxu0 0
    %353 = vmatprep.subr.bf16.mxu0 0
    %354 = vmatpush1.bf16.msra.mxu0 %v337
    %355 = vmatprep.subr.bf16.mxu0 0
    %356 = vmatpush1.bf16.msra.mxu0 %v336
    %357 = vmatprep.subr.bf16.mxu0 0
    %358 = vmatpush1.bf16.msra.mxu0 %v335
    %359 = vmatprep.subr.bf16.mxu0 0
    %360 = vmatpush1.bf16.msra.mxu0 %v334
    %361 = vmatprep.subr.bf16.mxu0 0
    %362 = vmatpush2.bf16.msra.mxu0 0
    %363 = vmatprep.subr.bf16.mxu0 0
    %364 = vmatpush2.bf16.msra.mxu0 0
    %365 = vmatprep.subr.bf16.mxu0 0
    %366 = vmatpush2.bf16.msra.mxu0 0
    %367 = vmatprep.subr.bf16.mxu0 0
    %368 = vmatpush2.bf16.msra.mxu0 0
    %369 = vmatprep.subr.bf16.mxu0 0
    %370 = vmatpush2.bf16.msra.mxu0 0
    %371 = vmatprep.subr.bf16.mxu0 0
    %372 = vmatpush2.bf16.msra.mxu0 0
    %373 = vmatprep.subr.bf16.mxu0 0
    %374 = vmatpush2.bf16.msra.mxu0 0
    %375 = vmatprep.subr.bf16.mxu0 0
    %376 = vmatpush2.bf16.msra.mxu0 0
    %377 = vmatprep.mubr.bf16.mxu0 0
    %378 = vmatmul.mubr.bf16.gmra.mxu0 %v343
    %v379 = vpop.f32.mrf.mxu0
    %v380 = vadd.f32 %v316, %v379
    %v381 = vpop.f32.mrf.mxu0
    %v382 = vpop.f32.mrf.mxu0
    %v383 = vpop.f32.mrf.mxu0
    %384 = vdwg.mxu0
    %385 = vst [vmem:[#allocation2] sm:$0xff] %v380
    // Predicated region
    $region38: #{mlp_forward.1} parent=1 // pred_check
      _
    $region39: #{mlp_forward.1} parent=1 // pred_check_branch
      %387 = sbr.rel (0) target = $region41
    $region40: #{mlp_forward.1} parent=1 // pred_region
      %s389 = ssub.s32 128, 128
      %390 = vsyncadd [#allocation3], %s389
      %s392 = sshll.u32 [#allocation2], 4
      %s393 = int_to_ptr.vmem [resolvable:$true] %s392
      %395 = dma.vmem_to_hbm [thread:$0]  %s393, 128, %s9, [#allocation3]
    $region41: #{mlp_forward.1} parent=1 // pred_fallthru
      _
    // Predicated region
    $region42: #{mlp_forward.1} parent=1 // pred_check
      _
    $region43: #{mlp_forward.1} parent=1 // pred_check_branch
      %397 = sbr.rel (0) target = $region45
    $region44: #{mlp_forward.1} parent=1 // pred_region
      %398 = dma.done [#allocation3], 128
    $region45: #{mlp_forward.1} parent=1 // pred_fallthru
      _
    %399 = vsyncpa [#allocation3], 1

</llo_original>
